<compile_context>
chip_gen: v7x
topology: tpu7x:2x2x1
jax: 0.10.0
libtpu: 0.0.40
codegen_flags: <defaults>
</compile_context>

<pallas_src>
import math

import jax
import jax.numpy as jnp
from jax.experimental import pallas as pl
from jax.experimental.pallas import tpu as pltpu

_LANE = 128


def _gcn_kernel(x_ref, adj_ref, w_ref, o_ref):
    # x_ref:   (bc_blk, N, F)   node features for this block of (b, c) pairs
    # adj_ref: (bc_blk, N, N)   adjacency per (b, c)
    # w_ref:   (F, Hp)          shared weight, output dim padded to 128-mult
    # o_ref:   (bc_blk, N, Hp)  output block, lane-dense last dim
    bc, n, f = x_ref.shape
    hp = w_ref.shape[1]

    x = x_ref[...]
    adj = adj_ref[...]
    w = w_ref[...]

    if f <= hp:
        # Reassociated order: (adj @ x) @ W.
        # Batched (N,N)@(N,F) per (b,c), then one fused (bc*N, F)@(F, Hp)
        # MXU call with the batch folded into M.
        ax = jnp.einsum("bij,bjf->bif", adj, x,
                        preferred_element_type=jnp.float32)
        out = jnp.dot(ax.reshape(bc * n, f).astype(w.dtype), w,
                      preferred_element_type=jnp.float32)
        o_ref[...] = out.reshape(bc, n, hp).astype(o_ref.dtype)
    else:
        # Classic order: adj @ (x @ W), batch fused into the shared-weight
        # matmul's M dimension.
        support = jnp.dot(x.reshape(bc * n, f), w,
                          preferred_element_type=jnp.float32)
        support = support.reshape(bc, n, hp).astype(adj.dtype)
        out = jnp.einsum("bij,bjh->bih", adj, support,
                         preferred_element_type=jnp.float32)
        o_ref[...] = out.astype(o_ref.dtype)


def gcn_forward(x, adj, weight, *, bc_block=None, vmem_budget_bytes=8 << 20):
    """x: (B, C, N, F) f32, adj: (B, C, N, N) f32, weight: (F, H) f32."""
    B, C, N, F = x.shape
    H = weight.shape[1]
    assert adj.shape == (B, C, N, N)
    assert weight.shape[0] == F

    BC = B * C
    # Collapse (B, C): contiguity-preserving reshapes done in XLA.
    x3 = x.reshape(BC, N, F)
    adj3 = adj.reshape(BC, N, N)

    # Pad the output feature dim to a lane multiple so the MXU result and
    # the stores are lane-dense (unmasked vst) instead of masked.
    H_pad = pl.cdiv(H, _LANE) * _LANE
    w_pad = weight if H_pad == H else jnp.pad(weight, ((0, 0), (0, H_pad - H)))

    # Pick the largest divisor of BC whose (double-buffered) per-step
    # working set fits the VMEM budget. Small problems -> one block, no
    # pipeline overhead; large ones -> BC-tiled, megacore-shardable.
    if bc_block is None:
        per_bc_bytes = 4 * (N * F + N * N + N * H_pad)
        w_bytes = 4 * F * H_pad
        bc_block = BC
        while bc_block > 1 and (2 * bc_block * per_bc_bytes + 2 * w_bytes
                                > vmem_budget_bytes):
            bc_block -= 1
            while BC % bc_block:
                bc_block -= 1
    assert BC % bc_block == 0
    grid = (BC // bc_block,)

    # Advisory cost hint for XLA's scheduler.
    if F <= H_pad:
        flops = 2 * BC * N * N * F + 2 * BC * N * F * H_pad
    else:
        flops = 2 * BC * N * F * H_pad + 2 * BC * N * N * H_pad
    bytes_accessed = 4 * (x3.size + adj3.size + w_pad.size + BC * N * H_pad)

    out3 = pl.pallas_call(
        _gcn_kernel,
        out_shape=jax.ShapeDtypeStruct((BC, N, H_pad), x.dtype),
        grid=grid,
        in_specs=[
            pl.BlockSpec((bc_block, N, F), lambda i: (i, 0, 0)),
            pl.BlockSpec((bc_block, N, N), lambda i: (i, 0, 0)),
            pl.BlockSpec((F, H_pad), lambda i: (0, 0)),
        ],
        out_specs=pl.BlockSpec((bc_block, N, H_pad), lambda i: (i, 0, 0)),
        compiler_params=pltpu.CompilerParams(
            dimension_semantics=("parallel",)),
        cost_estimate=pl.CostEstimate(
            flops=flops, transcendentals=0, bytes_accessed=bytes_accessed),
    )(x3, adj3, w_pad)

    out = out3[:, :, :H] if H_pad != H else out3
    return out.reshape(B, C, N, H)


def xavier_uniform(key, shape, gain):
    fan_in, fan_out = shape
    bound = gain * math.sqrt(6.0 / (fan_in + fan_out))
    return jax.random.uniform(key, shape, jnp.float32, -bound, bound)


if __name__ == "__main__":
    # Small shapes consistent with the module: batch=2, channels=4,
    # nodes=16, nfeat=16, nhid=32.
    B, C, N = 2, 4, 16
    nfeat, nhid = 16, 32

    key = jax.random.PRNGKey(0)
    kx, kadj, kw = jax.random.split(key, 3)

    x = jax.random.normal(kx, (B, C, N, nfeat), dtype=jnp.float32)
    adj = jax.random.normal(kadj, (B, C, N, N), dtype=jnp.float32)
    weight = xavier_uniform(kw, (nfeat, nhid), gain=math.sqrt(2.0))

    gcn = jax.jit(gcn_forward)
    out = gcn(x, adj, weight)
    out = jax.block_until_ready(out)

    # Reference check in plain JAX.
    ref = jnp.matmul(adj, jnp.matmul(x, weight))
    assert out.shape == (B, C, N, nhid)
    assert jnp.allclose(out, ref, atol=1e-4, rtol=1e-4)

    print("KERNEL_OK")
</pallas_src>

<mosaic_0001>
module attributes {stable_mosaic.version = 11 : i64} {
  func.func @_gcn_kernel(%arg0: i32, %arg1: memref<8x16x16xf32, #tpu.memory_space<vmem>>, %arg2: memref<8x16x16xf32, #tpu.memory_space<vmem>>, %arg3: memref<16x128xf32, #tpu.memory_space<vmem>>, %arg4: memref<8x16x128xf32, #tpu.memory_space<vmem>>) attributes {dimension_semantics = [#tpu.dimension_semantics<parallel>], iteration_bounds = array<i64: 1>, scalar_prefetch = 0 : i64, scratch_operands = 0 : i64, tpu.core_type = #tpu.core_type<tc>, window_params = [{transform_indices = @transform_0, window_bounds = array<i64: 8, 16, 16>}, {transform_indices = @transform_1, window_bounds = array<i64: 8, 16, 16>}, {pipeline_mode = #tpu.pipeline_mode<synchronous>, transform_indices = @transform_2, window_bounds = array<i64: 16, 128>}, {transform_indices = @transform_3, window_bounds = array<i64: 8, 16, 128>}]} {
    %c0 = arith.constant 0 : index
    %c0_0 = arith.constant 0 : index
    %c0_1 = arith.constant 0 : index
    %0 = vector.load %arg1[%c0, %c0_0, %c0_1] : memref<8x16x16xf32, #tpu.memory_space<vmem>>, vector<8x16x16xf32>
    %c0_2 = arith.constant 0 : index
    %c0_3 = arith.constant 0 : index
    %c0_4 = arith.constant 0 : index
    %1 = vector.load %arg2[%c0_2, %c0_3, %c0_4] : memref<8x16x16xf32, #tpu.memory_space<vmem>>, vector<8x16x16xf32>
    %c0_5 = arith.constant 0 : index
    %c0_6 = arith.constant 0 : index
    %2 = vector.load %arg3[%c0_5, %c0_6] : memref<16x128xf32, #tpu.memory_space<vmem>>, vector<16x128xf32>
    "tpu.trace_start"() <{level = 10 : i32, message = "bij,bjf->bif"}> : () -> ()
    %cst = arith.constant dense<0.000000e+00> : vector<8x16x16xf32>
    %3 = tpu.matmul %1, %0, %cst {dimension_numbers = #tpu.dot_dimension_numbers<[2], [1], [1], [2], [0, 0, 0, 1, 1, 2], [0], [0]>} : vector<8x16x16xf32>, vector<8x16x16xf32>, vector<8x16x16xf32> -> vector<8x16x16xf32>
    "tpu.trace_stop"() : () -> ()
    %4 = vector.shape_cast %3 : vector<8x16x16xf32> to vector<128x16xf32>
    %cst_7 = arith.constant dense<0.000000e+00> : vector<128x128xf32>
    %5 = tpu.matmul %4, %2, %cst_7 {dimension_numbers = #tpu.dot_dimension_numbers<[1], [0], [0], [1], [0, 0, 1, 1], [], []>} : vector<128x16xf32>, vector<16x128xf32>, vector<128x128xf32> -> vector<128x128xf32>
    %6 = vector.shape_cast %5 : vector<128x128xf32> to vector<8x16x128xf32>
    %c0_8 = arith.constant 0 : index
    %c0_9 = arith.constant 0 : index
    %c0_10 = arith.constant 0 : index
    %7 = vector.load %arg4[%c0_8, %c0_9, %c0_10] : memref<8x16x128xf32, #tpu.memory_space<vmem>>, vector<8x16x128xf32>
    tpu.vector_store %arg4[%c0_8, %c0_9, %c0_10], %6 {strides = array<i32>} : memref<8x16x128xf32, #tpu.memory_space<vmem>>, vector<8x16x128xf32>,
    return
  }
  func.func @transform_0(%arg0: i32) -> (i32, i32, i32) {
    %c0_i32 = arith.constant 0 : i32
    %c0_i32_0 = arith.constant 0 : i32
    %c0_i32_1 = arith.constant 0 : i32
    return %arg0, %c0_i32, %c0_i32_0 : i32, i32, i32
  }
  func.func @transform_1(%arg0: i32) -> (i32, i32, i32) {
    %c0_i32 = arith.constant 0 : i32
    %c0_i32_0 = arith.constant 0 : i32
    %c0_i32_1 = arith.constant 0 : i32
    return %arg0, %c0_i32, %c0_i32_0 : i32, i32, i32
  }
  func.func @transform_2(%arg0: i32) -> (i32, i32) {
    %c0_i32 = arith.constant 0 : i32
    %c0_i32_0 = arith.constant 0 : i32
    %c0_i32_1 = arith.constant 0 : i32
    return %c0_i32, %c0_i32_0 : i32, i32
  }
  func.func @transform_3(%arg0: i32) -> (i32, i32, i32) {
    %c0_i32 = arith.constant 0 : i32
    %c0_i32_0 = arith.constant 0 : i32
    %c0_i32_1 = arith.constant 0 : i32
    return %arg0, %c0_i32, %c0_i32_0 : i32, i32, i32
  }
}

</mosaic_0001>

<llo_original>
// kernel: gcn_forward.1
$region0: #{gcn_forward.1}
  #allocation0 [shape = 'u32[]', space=smem, size = 0x4, offset = 0x4, fixed_abs, tag = 'smem constant byte address 0x4 - core index']
  #allocation1 [shape = 'u32[144,128]{1,0:T(1,128)}', space=vmem, size = 0x12000, scoped, tag = 'internal scratch']
  %s0 = inlined_call_operand.hbm [shape: f32[8,16,16], index: 0, kind: input, shape index: {}]
  %s1 = inlined_call_operand.hbm [shape: f32[8,16,16], index: 1, kind: input, shape index: {}]
  %s2 = inlined_call_operand.vmem [shape: f32[16,128], index: 2, kind: input, shape index: {}]
  %s3 = inlined_call_operand.hbm [shape: f32[8,16,128], index: 3, kind: output, shape index: {}]
  %s4 = sld [smem:[#allocation0]]
  $region30: #{gcn_forward.1} parent=0
    _
  %s6 = ssub.s32 1, %s4
  %s7 = scalar_select 0, %s6, %s4
  $region1: #{gcn_forward.1} parent=0
    #allocation2 [shape = 'u8[65536]{0}', space=vmem, size = 0x10000, scoped, tag = 'input window, operand 0, single buffered']
    #allocation3 [shape = 's32[1]{0}', space=sflag, size = 0x4, scoped, tag = 'scoped memory for gcn_forward.1']
    #allocation4 [shape = 's32[1]{0}', space=sflag, size = 0x4, scoped, tag = 'scoped memory for gcn_forward.1']
    #allocation5 [shape = 'u8[65536]{0}', space=vmem, size = 0x10000, scoped, tag = 'input window, operand 1, single buffered']
    #allocation6 [shape = 's32[1]{0}', space=sflag, size = 0x4, scoped, tag = 'scoped memory for gcn_forward.1']
    #allocation7 [shape = 'u8[65536]{0}', space=vmem, size = 0x10000, scoped, tag = 'output window, operand 0, single buffered']
    %8 = vsyncpa [#allocation3], 0
    %9 = vsyncpa [#allocation6], 0
    %10 = vsyncpa [#allocation4], 0
    // Predicated region
    $region2: #{gcn_forward.1} parent=1 // pred_check
      _
    $region3: #{gcn_forward.1} parent=1 // pred_check_branch
      %12 = sbr.rel (0) target = $region5
    $region4: #{gcn_forward.1} parent=1 // pred_region
      %s14 = ssub.s32 2048, 2048
      %15 = vsyncadd [#allocation3], %s14
      %s16 = sshll.u32 [#allocation2], 4
      %s17 = int_to_ptr.vmem [resolvable:$true] %s16
      %22 = dma.hbm_to_vmem [thread:$0]  %s0, 2048, %s17, [#allocation3], 128, 128, 8
    $region5: #{gcn_forward.1} parent=1 // pred_fallthru
      _
    // Predicated region
    $region6: #{gcn_forward.1} parent=1 // pred_check
      _
    $region7: #{gcn_forward.1} parent=1 // pred_check_branch
      %24 = sbr.rel (0) target = $region9
    $region8: #{gcn_forward.1} parent=1 // pred_region
      %s26 = ssub.s32 2048, 2048
      %27 = vsyncadd [#allocation6], %s26
      %s28 = sshll.u32 [#allocation5], 4
      %s29 = int_to_ptr.vmem [resolvable:$true] %s28
      %34 = dma.hbm_to_vmem [thread:$0]  %s1, 2048, %s29, [#allocation6], 128, 128, 8
    $region9: #{gcn_forward.1} parent=1 // pred_fallthru
      _
    // Predicated region
    $region10: #{gcn_forward.1} parent=1 // pred_check
      _
    $region11: #{gcn_forward.1} parent=1 // pred_check_branch
      %36 = sbr.rel (0) target = $region13
    $region12: #{gcn_forward.1} parent=1 // pred_region
      _
    $region13: #{gcn_forward.1} parent=1 // pred_fallthru
      _
    // Predicated region
    $region14: #{gcn_forward.1} parent=1 // pred_check
      _
    $region15: #{gcn_forward.1} parent=1 // pred_check_branch
      %38 = sbr.rel (0) target = $region17
    $region16: #{gcn_forward.1} parent=1 // pred_region
      %39 = dma.done [#allocation3], 2048
    $region17: #{gcn_forward.1} parent=1 // pred_fallthru
      _
    // Predicated region
    $region18: #{gcn_forward.1} parent=1 // pred_check
      _
    $region19: #{gcn_forward.1} parent=1 // pred_check_branch
      %41 = sbr.rel (0) target = $region21
    $region20: #{gcn_forward.1} parent=1 // pred_region
      %42 = dma.done [#allocation6], 2048
    $region21: #{gcn_forward.1} parent=1 // pred_fallthru
      _
    %v43 = vld [vmem:[#allocation2] sm:$0xff]
    %v44 = vld [vmem:[#allocation2 + $0x8] sm:$0xff]
    %v45 = vld [vmem:[#allocation2 + $0x10] sm:$0xff]
    %v46 = vld [vmem:[#allocation2 + $0x18] sm:$0xff]
    %v47 = vld [vmem:[#allocation2 + $0x20] sm:$0xff]
    %v48 = vld [vmem:[#allocation2 + $0x28] sm:$0xff]
    %v49 = vld [vmem:[#allocation2 + $0x30] sm:$0xff]
    %v50 = vld [vmem:[#allocation2 + $0x38] sm:$0xff]
    %v51 = vld [vmem:[#allocation2 + $0x40] sm:$0xff]
    %v52 = vld [vmem:[#allocation2 + $0x48] sm:$0xff]
    %v53 = vld [vmem:[#allocation2 + $0x50] sm:$0xff]
    %v54 = vld [vmem:[#allocation2 + $0x58] sm:$0xff]
    %v55 = vld [vmem:[#allocation2 + $0x60] sm:$0xff]
    %v56 = vld [vmem:[#allocation2 + $0x68] sm:$0xff]
    %v57 = vld [vmem:[#allocation2 + $0x70] sm:$0xff]
    %v58 = vld [vmem:[#allocation2 + $0x78] sm:$0xff]
    %v59 = vld [vmem:[#allocation5] sm:$0xff]
    %v60 = vld [vmem:[#allocation5 + $0x8] sm:$0xff]
    %v61 = vld [vmem:[#allocation5 + $0x10] sm:$0xff]
    %v62 = vld [vmem:[#allocation5 + $0x18] sm:$0xff]
    %v63 = vld [vmem:[#allocation5 + $0x20] sm:$0xff]
    %v64 = vld [vmem:[#allocation5 + $0x28] sm:$0xff]
    %v65 = vld [vmem:[#allocation5 + $0x30] sm:$0xff]
    %v66 = vld [vmem:[#allocation5 + $0x38] sm:$0xff]
    %v67 = vld [vmem:[#allocation5 + $0x40] sm:$0xff]
    %v68 = vld [vmem:[#allocation5 + $0x48] sm:$0xff]
    %v69 = vld [vmem:[#allocation5 + $0x50] sm:$0xff]
    %v70 = vld [vmem:[#allocation5 + $0x58] sm:$0xff]
    %v71 = vld [vmem:[#allocation5 + $0x60] sm:$0xff]
    %v72 = vld [vmem:[#allocation5 + $0x68] sm:$0xff]
    %v73 = vld [vmem:[#allocation5 + $0x70] sm:$0xff]
    %v74 = vld [vmem:[#allocation5 + $0x78] sm:$0xff]
    %v75 = vld [vmem:[%s2] sm:$0xff]
    %v76 = vld [vmem:[%s2 + $0x8] sm:$0xff]
    %vm77 = vcmask 130048
    %v79 = vsel %vm77, %v59, 0
    %v82 = vsel %vm77, %v60, 0
    %84 = vmatprep.subr.mxu0 0.0
    %85 = vmatpush1.msra.mxu0 %v43
    %86 = vmatprep.subr.mxu0 0.0
    %87 = vmatpush1.msra.mxu0 %v44
    %88 = vmatprep.subr.mxu0 0.0
    %89 = vmatpush1.msra.mxu0 0.0
    %90 = vmatprep.subr.mxu0 0.0
    %91 = vmatpush1.msra.mxu0 0.0
    %92 = vmatprep.subr.mxu0 0.0
    %93 = vmatpush1.msra.mxu0 0.0
    %94 = vmatprep.subr.mxu0 0.0
    %95 = vmatpush1.msra.mxu0 0.0
    %96 = vmatprep.subr.mxu0 0.0
    %97 = vmatpush1.msra.mxu0 0.0
    %98 = vmatprep.subr.mxu0 0.0
    %99 = vmatpush1.msra.mxu0 0.0
    %100 = vmatprep.subr.mxu0 0.0
    %101 = vmatpush1.msra.mxu0 0.0
    %102 = vmatprep.subr.mxu0 0.0
    %103 = vmatpush1.msra.mxu0 0.0
    %104 = vmatprep.subr.mxu0 0.0
    %105 = vmatpush1.msra.mxu0 0.0
    %106 = vmatprep.subr.mxu0 0.0
    %107 = vmatpush1.msra.mxu0 0.0
    %108 = vmatprep.subr.mxu0 0.0
    %109 = vmatpush1.msra.mxu0 0.0
    %110 = vmatprep.subr.mxu0 0.0
    %111 = vmatpush1.msra.mxu0 0.0
    %112 = vmatprep.subr.mxu0 0.0
    %113 = vmatpush1.msra.mxu0 0.0
    %114 = vmatprep.subr.mxu0 0.0
    %115 = vmatpush1.msra.mxu0 0.0
    %116 = vmatprep.subr.mxu0 0.0
    %117 = vmatpush1.msra.mxu0 0.0
    %118 = vmatprep.subr.mxu0 0.0
    %119 = vmatpush1.msra.mxu0 0.0
    %120 = vmatprep.subr.mxu0 0.0
    %121 = vmatpush1.msra.mxu0 0.0
    %122 = vmatprep.subr.mxu0 0.0
    %123 = vmatpush1.msra.mxu0 0.0
    %124 = vmatprep.subr.mxu0 0.0
    %125 = vmatpush1.msra.mxu0 0.0
    %126 = vmatprep.subr.mxu0 0.0
    %127 = vmatpush1.msra.mxu0 0.0
    %128 = vmatprep.subr.mxu0 0.0
    %129 = vmatpush1.msra.mxu0 0.0
    %130 = vmatprep.subr.mxu0 0.0
    %131 = vmatpush1.msra.mxu0 0.0
    %132 = vmatprep.subr.mxu0 0.0
    %133 = vmatpush1.msra.mxu0 0.0
    %134 = vmatprep.subr.mxu0 0.0
    %135 = vmatpush1.msra.mxu0 0.0
    %136 = vmatprep.subr.mxu0 0.0
    %137 = vmatpush1.msra.mxu0 0.0
    %138 = vmatprep.subr.mxu0 0.0
    %139 = vmatpush1.msra.mxu0 0.0
    %140 = vmatprep.subr.mxu0 0.0
    %141 = vmatpush1.msra.mxu0 0.0
    %142 = vmatprep.subr.mxu0 0.0
    %143 = vmatpush1.msra.mxu0 0.0
    %144 = vmatprep.subr.mxu0 0.0
    %145 = vmatpush1.msra.mxu0 0.0
    %146 = vmatprep.subr.mxu0 0.0
    %147 = vmatpush1.msra.mxu0 0.0
    %148 = vmatprep.mubr.f32.mxu0 0.0
    %149 = vmatmul.mubr.f32.gmra.mrb[0].mxu0 %v79
    %v150 = vpop.f32.mrb[0].mxu0
    %v151 = vadd.f32 0.0, %v150
    %v152 = vpop.f32.mrb[0].mxu0
    %153 = vmatprep.mubr.f32.mxu0 0.0
    %154 = vmatmul.mubr.f32.gmra.mrb[0].mxu0 %v82
    %v155 = vpop.f32.mrb[0].mxu0
    %v156 = vadd.f32 0.0, %v155
    %v157 = vpop.f32.mrb[0].mxu0
    %158 = vdwg.mxu0
    %v160 = vsel %vm77, %v61, 0
    %v163 = vsel %vm77, %v62, 0
    %165 = vmatprep.subr.mxu0 0.0
    %166 = vmatpush1.msra.mxu0 %v45
    %167 = vmatprep.subr.mxu0 0.0
    %168 = vmatpush1.msra.mxu0 %v46
    %169 = vmatprep.subr.mxu0 0.0
    %170 = vmatpush1.msra.mxu0 0.0
    %171 = vmatprep.subr.mxu0 0.0
    %172 = vmatpush1.msra.mxu0 0.0
    %173 = vmatprep.subr.mxu0 0.0
    %174 = vmatpush1.msra.mxu0 0.0
    %175 = vmatprep.subr.mxu0 0.0
    %176 = vmatpush1.msra.mxu0 0.0
    %177 = vmatprep.subr.mxu0 0.0
    %178 = vmatpush1.msra.mxu0 0.0
    %179 = vmatprep.subr.mxu0 0.0
    %180 = vmatpush1.msra.mxu0 0.0
    %181 = vmatprep.subr.mxu0 0.0
    %182 = vmatpush1.msra.mxu0 0.0
    %183 = vmatprep.subr.mxu0 0.0
    %184 = vmatpush1.msra.mxu0 0.0
    %185 = vmatprep.subr.mxu0 0.0
    %186 = vmatpush1.msra.mxu0 0.0
    %187 = vmatprep.subr.mxu0 0.0
    %188 = vmatpush1.msra.mxu0 0.0
    %189 = vmatprep.subr.mxu0 0.0
    %190 = vmatpush1.msra.mxu0 0.0
    %191 = vmatprep.subr.mxu0 0.0
    %192 = vmatpush1.msra.mxu0 0.0
    %193 = vmatprep.subr.mxu0 0.0
    %194 = vmatpush1.msra.mxu0 0.0
    %195 = vmatprep.subr.mxu0 0.0
    %196 = vmatpush1.msra.mxu0 0.0
    %197 = vmatprep.subr.mxu0 0.0
    %198 = vmatpush1.msra.mxu0 0.0
    %199 = vmatprep.subr.mxu0 0.0
    %200 = vmatpush1.msra.mxu0 0.0
    %201 = vmatprep.subr.mxu0 0.0
    %202 = vmatpush1.msra.mxu0 0.0
    %203 = vmatprep.subr.mxu0 0.0
    %204 = vmatpush1.msra.mxu0 0.0
    %205 = vmatprep.subr.mxu0 0.0
    %206 = vmatpush1.msra.mxu0 0.0
    %207 = vmatprep.subr.mxu0 0.0
    %208 = vmatpush1.msra.mxu0 0.0
    %209 = vmatprep.subr.mxu0 0.0
    %210 = vmatpush1.msra.mxu0 0.0
    %211 = vmatprep.subr.mxu0 0.0
    %212 = vmatpush1.msra.mxu0 0.0
    %213 = vmatprep.subr.mxu0 0.0
    %214 = vmatpush1.msra.mxu0 0.0
    %215 = vmatprep.subr.mxu0 0.0
    %216 = vmatpush1.msra.mxu0 0.0
    %217 = vmatprep.subr.mxu0 0.0
    %218 = vmatpush1.msra.mxu0 0.0
    %219 = vmatprep.subr.mxu0 0.0
    %220 = vmatpush1.msra.mxu0 0.0
    %221 = vmatprep.subr.mxu0 0.0
    %222 = vmatpush1.msra.mxu0 0.0
    %223 = vmatprep.subr.mxu0 0.0
    %224 = vmatpush1.msra.mxu0 0.0
    %225 = vmatprep.subr.mxu0 0.0
    %226 = vmatpush1.msra.mxu0 0.0
    %227 = vmatprep.subr.mxu0 0.0
    %228 = vmatpush1.msra.mxu0 0.0
    %229 = vmatprep.mubr.f32.mxu0 0.0
    %230 = vmatmul.mubr.f32.gmra.mrb[0].mxu0 %v160
    %v231 = vpop.f32.mrb[0].mxu0
    %v232 = vadd.f32 0.0, %v231
    %v233 = vpop.f32.mrb[0].mxu0
    %234 = vmatprep.mubr.f32.mxu0 0.0
    %235 = vmatmul.mubr.f32.gmra.mrb[0].mxu0 %v163
    %v236 = vpop.f32.mrb[0].mxu0
    %v237 = vadd.f32 0.0, %v236
    %v238 = vpop.f32.mrb[0].mxu0
    %239 = vdwg.mxu0
    %v241 = vsel %vm77, %v63, 0
    %v244 = vsel %vm77, %v64, 0
    %246 = vmatprep.subr.mxu0 0.0
    %247 = vmatpush1.msra.mxu0 %v47
    %248 = vmatprep.subr.mxu0 0.0
    %249 = vmatpush1.msra.mxu0 %v48
    %250 = vmatprep.subr.mxu0 0.0
    %251 = vmatpush1.msra.mxu0 0.0
    %252 = vmatprep.subr.mxu0 0.0
    %253 = vmatpush1.msra.mxu0 0.0
    %254 = vmatprep.subr.mxu0 0.0
    %255 = vmatpush1.msra.mxu0 0.0
    %256 = vmatprep.subr.mxu0 0.0
    %257 = vmatpush1.msra.mxu0 0.0
    %258 = vmatprep.subr.mxu0 0.0
    %259 = vmatpush1.msra.mxu0 0.0
    %260 = vmatprep.subr.mxu0 0.0
    %261 = vmatpush1.msra.mxu0 0.0
    %262 = vmatprep.subr.mxu0 0.0
    %263 = vmatpush1.msra.mxu0 0.0
    %264 = vmatprep.subr.mxu0 0.0
    %265 = vmatpush1.msra.mxu0 0.0
    %266 = vmatprep.subr.mxu0 0.0
    %267 = vmatpush1.msra.mxu0 0.0
    %268 = vmatprep.subr.mxu0 0.0
    %269 = vmatpush1.msra.mxu0 0.0
    %270 = vmatprep.subr.mxu0 0.0
    %271 = vmatpush1.msra.mxu0 0.0
    %272 = vmatprep.subr.mxu0 0.0
    %273 = vmatpush1.msra.mxu0 0.0
    %274 = vmatprep.subr.mxu0 0.0
    %275 = vmatpush1.msra.mxu0 0.0
    %276 = vmatprep.subr.mxu0 0.0
    %277 = vmatpush1.msra.mxu0 0.0
    %278 = vmatprep.subr.mxu0 0.0
    %279 = vmatpush1.msra.mxu0 0.0
    %280 = vmatprep.subr.mxu0 0.0
    %281 = vmatpush1.msra.mxu0 0.0
    %282 = vmatprep.subr.mxu0 0.0
    %283 = vmatpush1.msra.mxu0 0.0
    %284 = vmatprep.subr.mxu0 0.0
    %285 = vmatpush1.msra.mxu0 0.0
    %286 = vmatprep.subr.mxu0 0.0
    %287 = vmatpush1.msra.mxu0 0.0
    %288 = vmatprep.subr.mxu0 0.0
    %289 = vmatpush1.msra.mxu0 0.0
    %290 = vmatprep.subr.mxu0 0.0
    %291 = vmatpush1.msra.mxu0 0.0
    %292 = vmatprep.subr.mxu0 0.0
    %293 = vmatpush1.msra.mxu0 0.0
    %294 = vmatprep.subr.mxu0 0.0
    %295 = vmatpush1.msra.mxu0 0.0
    %296 = vmatprep.subr.mxu0 0.0
    %297 = vmatpush1.msra.mxu0 0.0
    %298 = vmatprep.subr.mxu0 0.0
    %299 = vmatpush1.msra.mxu0 0.0
    %300 = vmatprep.subr.mxu0 0.0
    %301 = vmatpush1.msra.mxu0 0.0
    %302 = vmatprep.subr.mxu0 0.0
    %303 = vmatpush1.msra.mxu0 0.0
    %304 = vmatprep.subr.mxu0 0.0
    %305 = vmatpush1.msra.mxu0 0.0
    %306 = vmatprep.subr.mxu0 0.0
    %307 = vmatpush1.msra.mxu0 0.0
    %308 = vmatprep.subr.mxu0 0.0
    %309 = vmatpush1.msra.mxu0 0.0
    %310 = vmatprep.mubr.f32.mxu0 0.0
    %311 = vmatmul.mubr.f32.gmra.mrb[0].mxu0 %v241
    %v312 = vpop.f32.mrb[0].mxu0
    %v313 = vadd.f32 0.0, %v312
    %v314 = vpop.f32.mrb[0].mxu0
    %315 = vmatprep.mubr.f32.mxu0 0.0
    %316 = vmatmul.mubr.f32.gmra.mrb[0].mxu0 %v244
    %v317 = vpop.f32.mrb[0].mxu0
    %v318 = vadd.f32 0.0, %v317
    %v319 = vpop.f32.mrb[0].mxu0
    %320 = vdwg.mxu0
    %v322 = vsel %vm77, %v65, 0
    %v325 = vsel %vm77, %v66, 0
    %327 = vmatprep.subr.mxu0 0.0
    %328 = vmatpush1.msra.mxu0 %v49
    %329 = vmatprep.subr.mxu0 0.0
    %330 = vmatpush1.msra.mxu0 %v50
    %331 = vmatprep.subr.mxu0 0.0
    %332 = vmatpush1.msra.mxu0 0.0
    %333 = vmatprep.subr.mxu0 0.0
    %334 = vmatpush1.msra.mxu0 0.0
    %335 = vmatprep.subr.mxu0 0.0
    %336 = vmatpush1.msra.mxu0 0.0
    %337 = vmatprep.subr.mxu0 0.0
    %338 = vmatpush1.msra.mxu0 0.0
    %339 = vmatprep.subr.mxu0 0.0
    %340 = vmatpush1.msra.mxu0 0.0
    %341 = vmatprep.subr.mxu0 0.0
    %342 = vmatpush1.msra.mxu0 0.0
    %343 = vmatprep.subr.mxu0 0.0
    %344 = vmatpush1.msra.mxu0 0.0
    %345 = vmatprep.subr.mxu0 0.0
    %346 = vmatpush1.msra.mxu0 0.0
    %347 = vmatprep.subr.mxu0 0.0
    %348 = vmatpush1.msra.mxu0 0.0
    %349 = vmatprep.subr.mxu0 0.0
    %350 = vmatpush1.msra.mxu0 0.0
    %351 = vmatprep.subr.mxu0 0.0
    %352 = vmatpush1.msra.mxu0 0.0
    %353 = vmatprep.subr.mxu0 0.0
    %354 = vmatpush1.msra.mxu0 0.0
    %355 = vmatprep.subr.mxu0 0.0
    %356 = vmatpush1.msra.mxu0 0.0
    %357 = vmatprep.subr.mxu0 0.0
    %358 = vmatpush1.msra.mxu0 0.0
    %359 = vmatprep.subr.mxu0 0.0
    %360 = vmatpush1.msra.mxu0 0.0
    %361 = vmatprep.subr.mxu0 0.0
    %362 = vmatpush1.msra.mxu0 0.0
    %363 = vmatprep.subr.mxu0 0.0
    %364 = vmatpush1.msra.mxu0 0.0
    %365 = vmatprep.subr.mxu0 0.0
    %366 = vmatpush1.msra.mxu0 0.0
    %367 = vmatprep.subr.mxu0 0.0
    %368 = vmatpush1.msra.mxu0 0.0
    %369 = vmatprep.subr.mxu0 0.0
    %370 = vmatpush1.msra.mxu0 0.0
    %371 = vmatprep.subr.mxu0 0.0
    %372 = vmatpush1.msra.mxu0 0.0
    %373 = vmatprep.subr.mxu0 0.0
    %374 = vmatpush1.msra.mxu0 0.0
    %375 = vmatprep.subr.mxu0 0.0
    %376 = vmatpush1.msra.mxu0 0.0
    %377 = vmatprep.subr.mxu0 0.0
    %378 = vmatpush1.msra.mxu0 0.0
    %379 = vmatprep.subr.mxu0 0.0
    %380 = vmatpush1.msra.mxu0 0.0
    %381 = vmatprep.subr.mxu0 0.0
    %382 = vmatpush1.msra.mxu0 0.0
    %383 = vmatprep.subr.mxu0 0.0
    %384 = vmatpush1.msra.mxu0 0.0
    %385 = vmatprep.subr.mxu0 0.0
    %386 = vmatpush1.msra.mxu0 0.0
    %387 = vmatprep.subr.mxu0 0.0
    %388 = vmatpush1.msra.mxu0 0.0
    %389 = vmatprep.subr.mxu0 0.0
    %390 = vmatpush1.msra.mxu0 0.0
    %391 = vmatprep.mubr.f32.mxu0 0.0
    %392 = vmatmul.mubr.f32.gmra.mrb[0].mxu0 %v322
    %v393 = vpop.f32.mrb[0].mxu0
    %v394 = vadd.f32 0.0, %v393
    %v395 = vpop.f32.mrb[0].mxu0
    %396 = vmatprep.mubr.f32.mxu0 0.0
    %397 = vmatmul.mubr.f32.gmra.mrb[0].mxu0 %v325
    %v398 = vpop.f32.mrb[0].mxu0
    %v399 = vadd.f32 0.0, %v398
    %v400 = vpop.f32.mrb[0].mxu0
    %401 = vdwg.mxu0
    %v403 = vsel %vm77, %v67, 0
    %v406 = vsel %vm77, %v68, 0
    %408 = vmatprep.subr.mxu0 0.0
    %409 = vmatpush1.msra.mxu0 %v51
    %410 = vmatprep.subr.mxu0 0.0
    %411 = vmatpush1.msra.mxu0 %v52
    %412 = vmatprep.subr.mxu0 0.0
    %413 = vmatpush1.msra.mxu0 0.0
    %414 = vmatprep.subr.mxu0 0.0
    %415 = vmatpush1.msra.mxu0 0.0
    %416 = vmatprep.subr.mxu0 0.0
    %417 = vmatpush1.msra.mxu0 0.0
    %418 = vmatprep.subr.mxu0 0.0
    %419 = vmatpush1.msra.mxu0 0.0
    %420 = vmatprep.subr.mxu0 0.0
    %421 = vmatpush1.msra.mxu0 0.0
    %422 = vmatprep.subr.mxu0 0.0
    %423 = vmatpush1.msra.mxu0 0.0
    %424 = vmatprep.subr.mxu0 0.0
    %425 = vmatpush1.msra.mxu0 0.0
    %426 = vmatprep.subr.mxu0 0.0
    %427 = vmatpush1.msra.mxu0 0.0
    %428 = vmatprep.subr.mxu0 0.0
    %429 = vmatpush1.msra.mxu0 0.0
    %430 = vmatprep.subr.mxu0 0.0
    %431 = vmatpush1.msra.mxu0 0.0
    %432 = vmatprep.subr.mxu0 0.0
    %433 = vmatpush1.msra.mxu0 0.0
    %434 = vmatprep.subr.mxu0 0.0
    %435 = vmatpush1.msra.mxu0 0.0
    %436 = vmatprep.subr.mxu0 0.0
    %437 = vmatpush1.msra.mxu0 0.0
    %438 = vmatprep.subr.mxu0 0.0
    %439 = vmatpush1.msra.mxu0 0.0
    %440 = vmatprep.subr.mxu0 0.0
    %441 = vmatpush1.msra.mxu0 0.0
    %442 = vmatprep.subr.mxu0 0.0
    %443 = vmatpush1.msra.mxu0 0.0
    %444 = vmatprep.subr.mxu0 0.0
    %445 = vmatpush1.msra.mxu0 0.0
    %446 = vmatprep.subr.mxu0 0.0
    %447 = vmatpush1.msra.mxu0 0.0
    %448 = vmatprep.subr.mxu0 0.0
    %449 = vmatpush1.msra.mxu0 0.0
    %450 = vmatprep.subr.mxu0 0.0
    %451 = vmatpush1.msra.mxu0 0.0
    %452 = vmatprep.subr.mxu0 0.0
    %453 = vmatpush1.msra.mxu0 0.0
    %454 = vmatprep.subr.mxu0 0.0
    %455 = vmatpush1.msra.mxu0 0.0
    %456 = vmatprep.subr.mxu0 0.0
    %457 = vmatpush1.msra.mxu0 0.0
    %458 = vmatprep.subr.mxu0 0.0
    %459 = vmatpush1.msra.mxu0 0.0
    %460 = vmatprep.subr.mxu0 0.0
    %461 = vmatpush1.msra.mxu0 0.0
    %462 = vmatprep.subr.mxu0 0.0
    %463 = vmatpush1.msra.mxu0 0.0
    %464 = vmatprep.subr.mxu0 0.0
    %465 = vmatpush1.msra.mxu0 0.0
    %466 = vmatprep.subr.mxu0 0.0
    %467 = vmatpush1.msra.mxu0 0.0
    %468 = vmatprep.subr.mxu0 0.0
    %469 = vmatpush1.msra.mxu0 0.0
    %470 = vmatprep.subr.mxu0 0.0
    %471 = vmatpush1.msra.mxu0 0.0
    %472 = vmatprep.mubr.f32.mxu0 0.0
    %473 = vmatmul.mubr.f32.gmra.mrb[0].mxu0 %v403
    %v474 = vpop.f32.mrb[0].mxu0
    %v475 = vadd.f32 0.0, %v474
    %v476 = vpop.f32.mrb[0].mxu0
    %477 = vmatprep.mubr.f32.mxu0 0.0
    %478 = vmatmul.mubr.f32.gmra.mrb[0].mxu0 %v406
    %v479 = vpop.f32.mrb[0].mxu0
    %v480 = vadd.f32 0.0, %v479
    %v481 = vpop.f32.mrb[0].mxu0
    %482 = vdwg.mxu0
    %v484 = vsel %vm77, %v69, 0
    %v487 = vsel %vm77, %v70, 0
    %489 = vmatprep.subr.mxu0 0.0
    %490 = vmatpush1.msra.mxu0 %v53
    %491 = vmatprep.subr.mxu0 0.0
    %492 = vmatpush1.msra.mxu0 %v54
    %493 = vmatprep.subr.mxu0 0.0
    %494 = vmatpush1.msra.mxu0 0.0
    %495 = vmatprep.subr.mxu0 0.0
    %496 = vmatpush1.msra.mxu0 0.0
    %497 = vmatprep.subr.mxu0 0.0
    %498 = vmatpush1.msra.mxu0 0.0
    %499 = vmatprep.subr.mxu0 0.0
    %500 = vmatpush1.msra.mxu0 0.0
    %501 = vmatprep.subr.mxu0 0.0
    %502 = vmatpush1.msra.mxu0 0.0
    %503 = vmatprep.subr.mxu0 0.0
    %504 = vmatpush1.msra.mxu0 0.0
    %505 = vmatprep.subr.mxu0 0.0
    %506 = vmatpush1.msra.mxu0 0.0
    %507 = vmatprep.subr.mxu0 0.0
    %508 = vmatpush1.msra.mxu0 0.0
    %509 = vmatprep.subr.mxu0 0.0
    %510 = vmatpush1.msra.mxu0 0.0
    %511 = vmatprep.subr.mxu0 0.0
    %512 = vmatpush1.msra.mxu0 0.0
    %513 = vmatprep.subr.mxu0 0.0
    %514 = vmatpush1.msra.mxu0 0.0
    %515 = vmatprep.subr.mxu0 0.0
    %516 = vmatpush1.msra.mxu0 0.0
    %517 = vmatprep.subr.mxu0 0.0
    %518 = vmatpush1.msra.mxu0 0.0
    %519 = vmatprep.subr.mxu0 0.0
    %520 = vmatpush1.msra.mxu0 0.0
    %521 = vmatprep.subr.mxu0 0.0
    %522 = vmatpush1.msra.mxu0 0.0
    %523 = vmatprep.subr.mxu0 0.0
    %524 = vmatpush1.msra.mxu0 0.0
    %525 = vmatprep.subr.mxu0 0.0
    %526 = vmatpush1.msra.mxu0 0.0
    %527 = vmatprep.subr.mxu0 0.0
    %528 = vmatpush1.msra.mxu0 0.0
    %529 = vmatprep.subr.mxu0 0.0
    %530 = vmatpush1.msra.mxu0 0.0
    %531 = vmatprep.subr.mxu0 0.0
    %532 = vmatpush1.msra.mxu0 0.0
    %533 = vmatprep.subr.mxu0 0.0
    %534 = vmatpush1.msra.mxu0 0.0
    %535 = vmatprep.subr.mxu0 0.0
    %536 = vmatpush1.msra.mxu0 0.0
    %537 = vmatprep.subr.mxu0 0.0
    %538 = vmatpush1.msra.mxu0 0.0
    %539 = vmatprep.subr.mxu0 0.0
    %540 = vmatpush1.msra.mxu0 0.0
    %541 = vmatprep.subr.mxu0 0.0
    %542 = vmatpush1.msra.mxu0 0.0
    %543 = vmatprep.subr.mxu0 0.0
    %544 = vmatpush1.msra.mxu0 0.0
    %545 = vmatprep.subr.mxu0 0.0
    %546 = vmatpush1.msra.mxu0 0.0
    %547 = vmatprep.subr.mxu0 0.0
    %548 = vmatpush1.msra.mxu0 0.0
    %549 = vmatprep.subr.mxu0 0.0
    %550 = vmatpush1.msra.mxu0 0.0
    %551 = vmatprep.subr.mxu0 0.0
    %552 = vmatpush1.msra.mxu0 0.0
    %553 = vmatprep.mubr.f32.mxu0 0.0
    %554 = vmatmul.mubr.f32.gmra.mrb[0].mxu0 %v484
    %v555 = vpop.f32.mrb[0].mxu0
    %v556 = vadd.f32 0.0, %v555
    %v557 = vpop.f32.mrb[0].mxu0
    %558 = vmatprep.mubr.f32.mxu0 0.0
    %559 = vmatmul.mubr.f32.gmra.mrb[0].mxu0 %v487
    %v560 = vpop.f32.mrb[0].mxu0
    %v561 = vadd.f32 0.0, %v560
    %v562 = vpop.f32.mrb[0].mxu0
    %563 = vdwg.mxu0
    %v565 = vsel %vm77, %v71, 0
    %v568 = vsel %vm77, %v72, 0
    %570 = vmatprep.subr.mxu0 0.0
    %571 = vmatpush1.msra.mxu0 %v55
    %572 = vmatprep.subr.mxu0 0.0
    %573 = vmatpush1.msra.mxu0 %v56
    %574 = vmatprep.subr.mxu0 0.0
    %575 = vmatpush1.msra.mxu0 0.0
    %576 = vmatprep.subr.mxu0 0.0
    %577 = vmatpush1.msra.mxu0 0.0
    %578 = vmatprep.subr.mxu0 0.0
    %579 = vmatpush1.msra.mxu0 0.0
    %580 = vmatprep.subr.mxu0 0.0
    %581 = vmatpush1.msra.mxu0 0.0
    %582 = vmatprep.subr.mxu0 0.0
    %583 = vmatpush1.msra.mxu0 0.0
    %584 = vmatprep.subr.mxu0 0.0
    %585 = vmatpush1.msra.mxu0 0.0
    %586 = vmatprep.subr.mxu0 0.0
    %587 = vmatpush1.msra.mxu0 0.0
    %588 = vmatprep.subr.mxu0 0.0
    %589 = vmatpush1.msra.mxu0 0.0
    %590 = vmatprep.subr.mxu0 0.0
    %591 = vmatpush1.msra.mxu0 0.0
    %592 = vmatprep.subr.mxu0 0.0
    %593 = vmatpush1.msra.mxu0 0.0
    %594 = vmatprep.subr.mxu0 0.0
    %595 = vmatpush1.msra.mxu0 0.0
    %596 = vmatprep.subr.mxu0 0.0
    %597 = vmatpush1.msra.mxu0 0.0
    %598 = vmatprep.subr.mxu0 0.0
    %599 = vmatpush1.msra.mxu0 0.0
    %600 = vmatprep.subr.mxu0 0.0
    %601 = vmatpush1.msra.mxu0 0.0
    %602 = vmatprep.subr.mxu0 0.0
    %603 = vmatpush1.msra.mxu0 0.0
    %604 = vmatprep.subr.mxu0 0.0
    %605 = vmatpush1.msra.mxu0 0.0
    %606 = vmatprep.subr.mxu0 0.0
    %607 = vmatpush1.msra.mxu0 0.0
    %608 = vmatprep.subr.mxu0 0.0
    %609 = vmatpush1.msra.mxu0 0.0
    %610 = vmatprep.subr.mxu0 0.0
    %611 = vmatpush1.msra.mxu0 0.0
    %612 = vmatprep.subr.mxu0 0.0
    %613 = vmatpush1.msra.mxu0 0.0
    %614 = vmatprep.subr.mxu0 0.0
    %615 = vmatpush1.msra.mxu0 0.0
    %616 = vmatprep.subr.mxu0 0.0
    %617 = vmatpush1.msra.mxu0 0.0
    %618 = vmatprep.subr.mxu0 0.0
    %619 = vmatpush1.msra.mxu0 0.0
    %620 = vmatprep.subr.mxu0 0.0
    %621 = vmatpush1.msra.mxu0 0.0
    %622 = vmatprep.subr.mxu0 0.0
    %623 = vmatpush1.msra.mxu0 0.0
    %624 = vmatprep.subr.mxu0 0.0
    %625 = vmatpush1.msra.mxu0 0.0
    %626 = vmatprep.subr.mxu0 0.0
    %627 = vmatpush1.msra.mxu0 0.0
    %628 = vmatprep.subr.mxu0 0.0
    %629 = vmatpush1.msra.mxu0 0.0
    %630 = vmatprep.subr.mxu0 0.0
    %631 = vmatpush1.msra.mxu0 0.0
    %632 = vmatprep.subr.mxu0 0.0
    %633 = vmatpush1.msra.mxu0 0.0
    %634 = vmatprep.mubr.f32.mxu0 0.0
    %635 = vmatmul.mubr.f32.gmra.mrb[0].mxu0 %v565
    %v636 = vpop.f32.mrb[0].mxu0
    %v637 = vadd.f32 0.0, %v636
    %v638 = vpop.f32.mrb[0].mxu0
    %639 = vmatprep.mubr.f32.mxu0 0.0
    %640 = vmatmul.mubr.f32.gmra.mrb[0].mxu0 %v568
    %v641 = vpop.f32.mrb[0].mxu0
    %v642 = vadd.f32 0.0, %v641
    %v643 = vpop.f32.mrb[0].mxu0
    %644 = vdwg.mxu0
    %v646 = vsel %vm77, %v73, 0
    %v649 = vsel %vm77, %v74, 0
    %651 = vmatprep.subr.mxu0 0.0
    %652 = vmatpush1.msra.mxu0 %v57
    %653 = vmatprep.subr.mxu0 0.0
    %654 = vmatpush1.msra.mxu0 %v58
    %655 = vmatprep.subr.mxu0 0.0
    %656 = vmatpush1.msra.mxu0 0.0
    %657 = vmatprep.subr.mxu0 0.0
    %658 = vmatpush1.msra.mxu0 0.0
    %659 = vmatprep.subr.mxu0 0.0
    %660 = vmatpush1.msra.mxu0 0.0
    %661 = vmatprep.subr.mxu0 0.0
    %662 = vmatpush1.msra.mxu0 0.0
    %663 = vmatprep.subr.mxu0 0.0
    %664 = vmatpush1.msra.mxu0 0.0
    %665 = vmatprep.subr.mxu0 0.0
    %666 = vmatpush1.msra.mxu0 0.0
    %667 = vmatprep.subr.mxu0 0.0
    %668 = vmatpush1.msra.mxu0 0.0
    %669 = vmatprep.subr.mxu0 0.0
    %670 = vmatpush1.msra.mxu0 0.0
    %671 = vmatprep.subr.mxu0 0.0
    %672 = vmatpush1.msra.mxu0 0.0
    %673 = vmatprep.subr.mxu0 0.0
    %674 = vmatpush1.msra.mxu0 0.0
    %675 = vmatprep.subr.mxu0 0.0
    %676 = vmatpush1.msra.mxu0 0.0
    %677 = vmatprep.subr.mxu0 0.0
    %678 = vmatpush1.msra.mxu0 0.0
    %679 = vmatprep.subr.mxu0 0.0
    %680 = vmatpush1.msra.mxu0 0.0
    %681 = vmatprep.subr.mxu0 0.0
    %682 = vmatpush1.msra.mxu0 0.0
    %683 = vmatprep.subr.mxu0 0.0
    %684 = vmatpush1.msra.mxu0 0.0
    %685 = vmatprep.subr.mxu0 0.0
    %686 = vmatpush1.msra.mxu0 0.0
    %687 = vmatprep.subr.mxu0 0.0
    %688 = vmatpush1.msra.mxu0 0.0
    %689 = vmatprep.subr.mxu0 0.0
    %690 = vmatpush1.msra.mxu0 0.0
    %691 = vmatprep.subr.mxu0 0.0
    %692 = vmatpush1.msra.mxu0 0.0
    %693 = vmatprep.subr.mxu0 0.0
    %694 = vmatpush1.msra.mxu0 0.0
    %695 = vmatprep.subr.mxu0 0.0
    %696 = vmatpush1.msra.mxu0 0.0
    %697 = vmatprep.subr.mxu0 0.0
    %698 = vmatpush1.msra.mxu0 0.0
    %699 = vmatprep.subr.mxu0 0.0
    %700 = vmatpush1.msra.mxu0 0.0
    %701 = vmatprep.subr.mxu0 0.0
    %702 = vmatpush1.msra.mxu0 0.0
    %703 = vmatprep.subr.mxu0 0.0
    %704 = vmatpush1.msra.mxu0 0.0
    %705 = vmatprep.subr.mxu0 0.0
    %706 = vmatpush1.msra.mxu0 0.0
    %707 = vmatprep.subr.mxu0 0.0
    %708 = vmatpush1.msra.mxu0 0.0
    %709 = vmatprep.subr.mxu0 0.0
    %710 = vmatpush1.msra.mxu0 0.0
    %711 = vmatprep.subr.mxu0 0.0
    %712 = vmatpush1.msra.mxu0 0.0
    %713 = vmatprep.subr.mxu0 0.0
    %714 = vmatpush1.msra.mxu0 0.0
    %715 = vmatprep.mubr.f32.mxu0 0.0
    %716 = vmatmul.mubr.f32.gmra.mrb[0].mxu0 %v646
    %v717 = vpop.f32.mrb[0].mxu0
    %v718 = vadd.f32 0.0, %v717
    %v719 = vpop.f32.mrb[0].mxu0
    %720 = vmatprep.mubr.f32.mxu0 0.0
    %721 = vmatmul.mubr.f32.gmra.mrb[0].mxu0 %v649
    %v722 = vpop.f32.mrb[0].mxu0
    %v723 = vadd.f32 0.0, %v722
    %v724 = vpop.f32.mrb[0].mxu0
    %725 = vdwg.mxu0
    %v727 = vsel %vm77, %v151, 0
    %v730 = vsel %vm77, %v156, 0
    %v733 = vsel %vm77, %v232, 0
    %v736 = vsel %vm77, %v237, 0
    %v739 = vsel %vm77, %v313, 0
    %v742 = vsel %vm77, %v318, 0
    %v745 = vsel %vm77, %v394, 0
    %v748 = vsel %vm77, %v399, 0
    %v751 = vsel %vm77, %v475, 0
    %v754 = vsel %vm77, %v480, 0
    %v757 = vsel %vm77, %v556, 0
    %v760 = vsel %vm77, %v561, 0
    %v763 = vsel %vm77, %v637, 0
    %v766 = vsel %vm77, %v642, 0
    %v769 = vsel %vm77, %v718, 0
    %v772 = vsel %vm77, %v723, 0
    %774 = vmatprep.subr.mxu0 0.0
    %775 = vmatpush1.msra.mxu0 %v75
    %776 = vmatprep.subr.mxu0 0.0
    %777 = vmatpush1.msra.mxu0 %v76
    %778 = vmatprep.subr.mxu0 0.0
    %779 = vmatpush1.msra.mxu0 0.0
    %780 = vmatprep.subr.mxu0 0.0
    %781 = vmatpush1.msra.mxu0 0.0
    %782 = vmatprep.subr.mxu0 0.0
    %783 = vmatpush1.msra.mxu0 0.0
    %784 = vmatprep.subr.mxu0 0.0
    %785 = vmatpush1.msra.mxu0 0.0
    %786 = vmatprep.subr.mxu0 0.0
    %787 = vmatpush1.msra.mxu0 0.0
    %788 = vmatprep.subr.mxu0 0.0
    %789 = vmatpush1.msra.mxu0 0.0
    %790 = vmatprep.subr.mxu0 0.0
    %791 = vmatpush1.msra.mxu0 0.0
    %792 = vmatprep.subr.mxu0 0.0
    %793 = vmatpush1.msra.mxu0 0.0
    %794 = vmatprep.subr.mxu0 0.0
    %795 = vmatpush1.msra.mxu0 0.0
    %796 = vmatprep.subr.mxu0 0.0
    %797 = vmatpush1.msra.mxu0 0.0
    %798 = vmatprep.subr.mxu0 0.0
    %799 = vmatpush1.msra.mxu0 0.0
    %800 = vmatprep.subr.mxu0 0.0
    %801 = vmatpush1.msra.mxu0 0.0
    %802 = vmatprep.subr.mxu0 0.0
    %803 = vmatpush1.msra.mxu0 0.0
    %804 = vmatprep.subr.mxu0 0.0
    %805 = vmatpush1.msra.mxu0 0.0
    %806 = vmatprep.subr.mxu0 0.0
    %807 = vmatpush1.msra.mxu0 0.0
    %808 = vmatprep.subr.mxu0 0.0
    %809 = vmatpush1.msra.mxu0 0.0
    %810 = vmatprep.subr.mxu0 0.0
    %811 = vmatpush1.msra.mxu0 0.0
    %812 = vmatprep.subr.mxu0 0.0
    %813 = vmatpush1.msra.mxu0 0.0
    %814 = vmatprep.subr.mxu0 0.0
    %815 = vmatpush1.msra.mxu0 0.0
    %816 = vmatprep.subr.mxu0 0.0
    %817 = vmatpush1.msra.mxu0 0.0
    %818 = vmatprep.subr.mxu0 0.0
    %819 = vmatpush1.msra.mxu0 0.0
    %820 = vmatprep.subr.mxu0 0.0
    %821 = vmatpush1.msra.mxu0 0.0
    %822 = vmatprep.subr.mxu0 0.0
    %823 = vmatpush1.msra.mxu0 0.0
    %824 = vmatprep.subr.mxu0 0.0
    %825 = vmatpush1.msra.mxu0 0.0
    %826 = vmatprep.subr.mxu0 0.0
    %827 = vmatpush1.msra.mxu0 0.0
    %828 = vmatprep.subr.mxu0 0.0
    %829 = vmatpush1.msra.mxu0 0.0
    %830 = vmatprep.subr.mxu0 0.0
    %831 = vmatpush1.msra.mxu0 0.0
    %832 = vmatprep.subr.mxu0 0.0
    %833 = vmatpush1.msra.mxu0 0.0
    %834 = vmatprep.subr.mxu0 0.0
    %835 = vmatpush1.msra.mxu0 0.0
    %836 = vmatprep.subr.mxu0 0.0
    %837 = vmatpush1.msra.mxu0 0.0
    %838 = vmatprep.mubr.f32.mxu0 0.0
    %839 = vmatmul.mubr.f32.gmra.mrb[0].mxu0 %v727
    %v840 = vpop.f32.mrb[0].mxu0
    %v841 = vadd.f32 0.0, %v840
    %v842 = vpop.f32.mrb[0].mxu0
    %843 = vmatprep.mubr.f32.mxu0 0.0
    %844 = vmatmul.mubr.f32.gmra.mrb[0].mxu0 %v730
    %v845 = vpop.f32.mrb[0].mxu0
    %v846 = vadd.f32 0.0, %v845
    %v847 = vpop.f32.mrb[0].mxu0
    %848 = vmatprep.mubr.f32.mxu0 0.0
    %849 = vmatmul.mubr.f32.gmra.mrb[0].mxu0 %v733
    %v850 = vpop.f32.mrb[0].mxu0
    %v851 = vadd.f32 0.0, %v850
    %v852 = vpop.f32.mrb[0].mxu0
    %853 = vmatprep.mubr.f32.mxu0 0.0
    %854 = vmatmul.mubr.f32.gmra.mrb[0].mxu0 %v736
    %v855 = vpop.f32.mrb[0].mxu0
    %v856 = vadd.f32 0.0, %v855
    %v857 = vpop.f32.mrb[0].mxu0
    %858 = vmatprep.mubr.f32.mxu0 0.0
    %859 = vmatmul.mubr.f32.gmra.mrb[0].mxu0 %v739
    %v860 = vpop.f32.mrb[0].mxu0
    %v861 = vadd.f32 0.0, %v860
    %v862 = vpop.f32.mrb[0].mxu0
    %863 = vmatprep.mubr.f32.mxu0 0.0
    %864 = vmatmul.mubr.f32.gmra.mrb[0].mxu0 %v742
    %v865 = vpop.f32.mrb[0].mxu0
    %v866 = vadd.f32 0.0, %v865
    %v867 = vpop.f32.mrb[0].mxu0
    %868 = vmatprep.mubr.f32.mxu0 0.0
    %869 = vmatmul.mubr.f32.gmra.mrb[0].mxu0 %v745
    %v870 = vpop.f32.mrb[0].mxu0
    %v871 = vadd.f32 0.0, %v870
    %v872 = vpop.f32.mrb[0].mxu0
    %873 = vmatprep.mubr.f32.mxu0 0.0
    %874 = vmatmul.mubr.f32.gmra.mrb[0].mxu0 %v748
    %v875 = vpop.f32.mrb[0].mxu0
    %v876 = vadd.f32 0.0, %v875
    %v877 = vpop.f32.mrb[0].mxu0
    %878 = vmatprep.mubr.f32.mxu0 0.0
    %879 = vmatmul.mubr.f32.gmra.mrb[0].mxu0 %v751
    %v880 = vpop.f32.mrb[0].mxu0
    %v881 = vadd.f32 0.0, %v880
    %v882 = vpop.f32.mrb[0].mxu0
    %883 = vmatprep.mubr.f32.mxu0 0.0
    %884 = vmatmul.mubr.f32.gmra.mrb[0].mxu0 %v754
    %v885 = vpop.f32.mrb[0].mxu0
    %v886 = vadd.f32 0.0, %v885
    %v887 = vpop.f32.mrb[0].mxu0
    %888 = vmatprep.mubr.f32.mxu0 0.0
    %889 = vmatmul.mubr.f32.gmra.mrb[0].mxu0 %v757
    %v890 = vpop.f32.mrb[0].mxu0
    %v891 = vadd.f32 0.0, %v890
    %v892 = vpop.f32.mrb[0].mxu0
    %893 = vmatprep.mubr.f32.mxu0 0.0
    %894 = vmatmul.mubr.f32.gmra.mrb[0].mxu0 %v760
    %v895 = vpop.f32.mrb[0].mxu0
    %v896 = vadd.f32 0.0, %v895
    %v897 = vpop.f32.mrb[0].mxu0
    %898 = vmatprep.mubr.f32.mxu0 0.0
    %899 = vmatmul.mubr.f32.gmra.mrb[0].mxu0 %v763
    %v900 = vpop.f32.mrb[0].mxu0
    %v901 = vadd.f32 0.0, %v900
    %v902 = vpop.f32.mrb[0].mxu0
    %903 = vmatprep.mubr.f32.mxu0 0.0
    %904 = vmatmul.mubr.f32.gmra.mrb[0].mxu0 %v766
    %v905 = vpop.f32.mrb[0].mxu0
    %v906 = vadd.f32 0.0, %v905
    %v907 = vpop.f32.mrb[0].mxu0
    %908 = vmatprep.mubr.f32.mxu0 0.0
    %909 = vmatmul.mubr.f32.gmra.mrb[0].mxu0 %v769
    %v910 = vpop.f32.mrb[0].mxu0
    %v911 = vadd.f32 0.0, %v910
    %v912 = vpop.f32.mrb[0].mxu0
    %913 = vmatprep.mubr.f32.mxu0 0.0
    %914 = vmatmul.mubr.f32.gmra.mrb[0].mxu0 %v772
    %v915 = vpop.f32.mrb[0].mxu0
    %v916 = vadd.f32 0.0, %v915
    %v917 = vpop.f32.mrb[0].mxu0
    %918 = vdwg.mxu0
    %919 = vst [vmem:[#allocation7] sm:$0xff] %v841
    %920 = vst [vmem:[#allocation7 + $0x8] sm:$0xff] %v846
    %921 = vst [vmem:[#allocation7 + $0x10] sm:$0xff] %v851
    %922 = vst [vmem:[#allocation7 + $0x18] sm:$0xff] %v856
    %923 = vst [vmem:[#allocation7 + $0x20] sm:$0xff] %v861
    %924 = vst [vmem:[#allocation7 + $0x28] sm:$0xff] %v866
    %925 = vst [vmem:[#allocation7 + $0x30] sm:$0xff] %v871
    %926 = vst [vmem:[#allocation7 + $0x38] sm:$0xff] %v876
    %927 = vst [vmem:[#allocation7 + $0x40] sm:$0xff] %v881
    %928 = vst [vmem:[#allocation7 + $0x48] sm:$0xff] %v886
    %929 = vst [vmem:[#allocation7 + $0x50] sm:$0xff] %v891
    %930 = vst [vmem:[#allocation7 + $0x58] sm:$0xff] %v896
    %931 = vst [vmem:[#allocation7 + $0x60] sm:$0xff] %v901
    %932 = vst [vmem:[#allocation7 + $0x68] sm:$0xff] %v906
    %933 = vst [vmem:[#allocation7 + $0x70] sm:$0xff] %v911
    %934 = vst [vmem:[#allocation7 + $0x78] sm:$0xff] %v916
    // Predicated region
    $region22: #{gcn_forward.1} parent=1 // pred_check
      _
    $region23: #{gcn_forward.1} parent=1 // pred_check_branch
      %936 = sbr.rel (0) target = $region25
    $region24: #{gcn_forward.1} parent=1 // pred_region
      %s938 = ssub.s32 2048, 2048
      %939 = vsyncadd [#allocation4], %s938
      %s940 = sshll.u32 [#allocation7], 4
      %s941 = int_to_ptr.vmem [resolvable:$true] %s940
      %946 = dma.vmem_to_hbm [thread:$0]  %s941, 2048, %s3, [#allocation4], 128, 128, 8
    $region25: #{gcn_forward.1} parent=1 // pred_fallthru
      _
    // Predicated region
    $region26: #{gcn_forward.1} parent=1 // pred_check
      _
    $region27: #{gcn_forward.1} parent=1 // pred_check_branch
      %948 = sbr.rel (0) target = $region29
    $region28: #{gcn_forward.1} parent=1 // pred_region
      %949 = dma.done [#allocation4], 2048
    $region29: #{gcn_forward.1} parent=1 // pred_fallthru
      _
    %950 = vsyncpa [#allocation3], 1
    %951 = vsyncpa [#allocation6], 1
    %952 = vsyncpa [#allocation4], 1

</llo_original>
